<compile_context>
chip_gen: v6e
topology: v6e:2x2x1
jax: 0.10.0
libtpu: 0.0.40
codegen_flags: <defaults>
</compile_context>

<pallas_src>
import jax
import jax.numpy as jnp
from jax.experimental import pallas as pl
from jax.experimental.pallas import tpu as pltpu

# self.sharpness = 2.0 is a plain Python float in the original Model (not a
# learnable nn.Parameter), so it is baked in as a compile-time constant.
SHARPNESS = 2.0
INV_SHARPNESS = 1.0 / SHARPNESS


def hinge_kernel(params_ref, t_ref, o_ref):
    # params_ref: SMEM (4,) -> [pivot_t, pivot_y, slope_1, (slope_2-slope_1)/sharpness]
    p_t = params_ref[0]
    p_y = params_ref[1]
    m_1 = params_ref[2]
    dm_over_s = params_ref[3]  # (m_2 - m_1) / sharpness, folded in the wrapper

    t_c = t_ref[...] - p_t
    x_s = SHARPNESS * t_c
    # Numerically-stable softplus * sharpness (matches torch_softplus up to
    # the final 1/sharpness, which is folded into dm_over_s).
    sp_s = jnp.log1p(jnp.exp(-jnp.abs(x_s))) + jnp.maximum(x_s, 0.0)
    o_ref[...] = p_y + m_1 * t_c + dm_over_s * sp_s


def _vmem_budget_bytes():
    """Generation-aware scoped-VMEM budget keeping double-buffering intact."""
    try:
        cap = pltpu.get_tpu_info().vmem_capacity_bytes
    except Exception:
        cap = 64 << 20  # be conservative if the query is unavailable
    # v7x: 64 MiB/TC -> ~40 MiB scoped; v5e/v6e: 128 MiB -> ~48 MiB scoped.
    return (40 << 20) if cap <= (64 << 20) else (48 << 20)


def hinge_g_forward(t, params, *, lane_width=512, target_tile_bytes=8 << 20):
    """Elementwise hinge-g forward.

    t: array of any shape; params: [4] = [pivot_t, pivot_y, slope_1, slope_2].
    Streams a lane-dense [rows, lane_width] f32 slab through a 1-D "parallel"
    grid with ~target_tile_bytes per buffer (clamped to the VMEM budget).
    """
    orig_shape = t.shape
    orig_dtype = t.dtype
    t32 = t.astype(jnp.float32)
    p = params.astype(jnp.float32)

    # Scalar prep hoisted off the vector path (SMEM scalars, one fewer vmul).
    kparams = jnp.stack([p[0], p[1], p[2], (p[3] - p[2]) * INV_SHARPNESS])

    # Lane-dense layout: flatten & pad to a multiple of lane_width so every
    # store is an unmasked full-lane vst regardless of the caller's D.
    total = t32.size
    W = int(lane_width)
    flat = t32.reshape(-1)
    pad = (-total) % W
    if pad:
        flat = jnp.pad(flat, (0, pad))
    rows = flat.size // W
    x2d = flat.reshape(rows, W)

    itemsize = 4
    row_bytes = W * itemsize
    budget = _vmem_budget_bytes()

    # 2x(in) + 2x(out) double-buffered tiles + headroom must fit the budget.
    max_tile_bytes = max(row_bytes, (budget - (4 << 20)) // 4)
    tile_bytes = min(int(target_tile_bytes), max_tile_bytes)
    tile_rows = max(1, tile_bytes // row_bytes)

    # Keep >=2 grid steps for moderately sized arrays so the "parallel" axis
    # can shard across both TensorCores on v7x (no effect on v5e/v6e).
    total_bytes = rows * row_bytes
    if total_bytes >= (4 << 20):
        tile_rows = min(tile_rows, -(-rows // 2))

    if tile_rows >= rows:
        tile_rows = rows  # single block equal to the full array (always legal)
    else:
        tile_rows = max(8, (tile_rows // 8) * 8)  # (8,128)-aligned sublane dim

    grid = (pl.cdiv(rows, tile_rows),)
    vmem_limit = int(min(budget, max(4 << 20, 5 * tile_rows * row_bytes)))

    out2d = pl.pallas_call(
        hinge_kernel,
        out_shape=jax.ShapeDtypeStruct((rows, W), jnp.float32),
        grid=grid,
        in_specs=[
            pl.BlockSpec(memory_space=pltpu.SMEM),            # scalar params
            pl.BlockSpec((tile_rows, W), lambda i: (i, 0)),   # t tile
        ],
        out_specs=pl.BlockSpec((tile_rows, W), lambda i: (i, 0)),
        compiler_params=pltpu.CompilerParams(
            dimension_semantics=("parallel",),
            vmem_limit_bytes=vmem_limit,
        ),
    )(kparams, x2d)

    out = out2d.reshape(-1)
    if pad:
        out = out[:total]
    return out.reshape(orig_shape).astype(orig_dtype)


def reference_forward(t, params):
    p_t, p_y, m_1, m_2 = params[0], params[1], params[2], params[3]
    t_c = t.astype(jnp.float32) - p_t
    x_s = SHARPNESS * t_c
    sp = (jnp.log1p(jnp.exp(-jnp.abs(x_s))) + jnp.maximum(x_s, 0.0)) * INV_SHARPNESS
    return (p_y + m_1 * t_c + (m_2 - m_1) * sp).astype(t.dtype)


if __name__ == "__main__":
    key = jax.random.PRNGKey(0)
    k1, k2, k3 = jax.random.split(key, 3)

    # Parameters exactly as in Model.__init__:
    #   pivot_t=0.0, pivot_y=0.0, slope_1=0.0, slope_2=1.0, sharpness=2.0
    params = jnp.array([0.0, 0.0, 0.0, 1.0], dtype=jnp.float32)

    # (1) Small lane-aligned batch: single full-array block.
    t1 = jax.random.normal(k1, (16, 128), dtype=jnp.float32) * 3.0
    o1 = jax.block_until_ready(hinge_g_forward(t1, params))
    assert o1.shape == t1.shape and o1.dtype == t1.dtype
    assert jnp.allclose(o1, reference_forward(t1, params), rtol=1e-5, atol=1e-5)

    # (2) Narrow treatment vector [N, 1] with non-trivial params — exercises
    # the lane-dense flatten+pad path (no masked partial-lane stores).
    params2 = jnp.array([0.5, -1.0, 0.25, 1.5], dtype=jnp.float32)
    t2 = jax.random.normal(k2, (64, 1), dtype=jnp.float32) * 2.0
    o2 = jax.block_until_ready(hinge_g_forward(t2, params2))
    assert o2.shape == t2.shape and o2.dtype == t2.dtype
    assert jnp.allclose(o2, reference_forward(t2, params2), rtol=1e-5, atol=1e-5)

    # (3) Ragged shape + tiny tile budget -> multi-step grid with a masked
    # partial last block (padded rows are zeros; elementwise -> harmless).
    t3 = jax.random.normal(k3, (41, 40), dtype=jnp.float32)
    o3 = jax.block_until_ready(
        hinge_g_forward(t3, params2, lane_width=128, target_tile_bytes=8 * 128 * 4)
    )
    assert o3.shape == t3.shape and o3.dtype == t3.dtype
    assert jnp.allclose(o3, reference_forward(t3, params2), rtol=1e-5, atol=1e-5)

    print("KERNEL_OK")
</pallas_src>

<mosaic_0001>
module attributes {stable_mosaic.version = 11 : i64} {
  func.func @hinge_kernel(%arg0: i32, %arg1: memref<4xf32, #tpu.memory_space<smem>>, %arg2: memref<4x512xf32, #tpu.memory_space<vmem>>, %arg3: memref<4x512xf32, #tpu.memory_space<vmem>>) attributes {dimension_semantics = [#tpu.dimension_semantics<parallel>], iteration_bounds = array<i64: 1>, scalar_prefetch = 0 : i64, scratch_operands = 0 : i64, tpu.core_type = #tpu.core_type<tc>, window_params = [{transform_indices = @transform_0, window_bounds = array<i64: 4>}, {transform_indices = @transform_1, window_bounds = array<i64: 4, 512>}, {transform_indices = @transform_2, window_bounds = array<i64: 4, 512>}]} {
    %c0 = arith.constant 0 : index
    %0 = memref.load %arg1[%c0] : memref<4xf32, #tpu.memory_space<smem>>
    %c1 = arith.constant 1 : index
    %1 = memref.load %arg1[%c1] : memref<4xf32, #tpu.memory_space<smem>>
    %c2 = arith.constant 2 : index
    %2 = memref.load %arg1[%c2] : memref<4xf32, #tpu.memory_space<smem>>
    %c3 = arith.constant 3 : index
    %3 = memref.load %arg1[%c3] : memref<4xf32, #tpu.memory_space<smem>>
    %c0_0 = arith.constant 0 : index
    %c0_1 = arith.constant 0 : index
    %4 = vector.load %arg2[%c0_0, %c0_1] : memref<4x512xf32, #tpu.memory_space<vmem>>, vector<4x512xf32>
    %5 = vector.broadcast %0 : f32 to vector<4x512xf32>
    %6 = arith.subf %4, %5 : vector<4x512xf32>
    %cst = arith.constant 2.000000e+00 : f32
    %7 = vector.broadcast %cst : f32 to vector<4x512xf32>
    %8 = arith.mulf %7, %6 : vector<4x512xf32>
    %9 = math.absf %8 : vector<4x512xf32>
    %cst_2 = arith.constant 0.000000e+00 : f32
    %10 = vector.broadcast %cst_2 : f32 to vector<4x512xf32>
    %11 = arith.subf %10, %9 : vector<4x512xf32>
    %12 = math.exp %11 : vector<4x512xf32>
    %13 = math.log1p %12 : vector<4x512xf32>
    %cst_3 = arith.constant 0.000000e+00 : f32
    %14 = vector.broadcast %cst_3 : f32 to vector<4x512xf32>
    %15 = arith.maximumf %8, %14 : vector<4x512xf32>
    %16 = arith.addf %13, %15 : vector<4x512xf32>
    %17 = vector.broadcast %2 : f32 to vector<4x512xf32>
    %18 = arith.mulf %17, %6 : vector<4x512xf32>
    %19 = vector.broadcast %1 : f32 to vector<4x512xf32>
    %20 = arith.addf %19, %18 : vector<4x512xf32>
    %21 = vector.broadcast %3 : f32 to vector<4x512xf32>
    %22 = arith.mulf %21, %16 : vector<4x512xf32>
    %23 = arith.addf %20, %22 : vector<4x512xf32>
    %c0_4 = arith.constant 0 : index
    %c0_5 = arith.constant 0 : index
    %24 = vector.load %arg3[%c0_4, %c0_5] : memref<4x512xf32, #tpu.memory_space<vmem>>, vector<4x512xf32>
    tpu.vector_store %arg3[%c0_4, %c0_5], %23 {strides = array<i32>} : memref<4x512xf32, #tpu.memory_space<vmem>>, vector<4x512xf32>,
    return
  }
  func.func @transform_0(%arg0: i32) -> i32 {
    %c0_i32 = arith.constant 0 : i32
    %c0_i32_0 = arith.constant 0 : i32
    return %c0_i32 : i32
  }
  func.func @transform_1(%arg0: i32) -> (i32, i32) {
    %c0_i32 = arith.constant 0 : i32
    %c0_i32_0 = arith.constant 0 : i32
    return %arg0, %c0_i32 : i32, i32
  }
  func.func @transform_2(%arg0: i32) -> (i32, i32) {
    %c0_i32 = arith.constant 0 : i32
    %c0_i32_0 = arith.constant 0 : i32
    return %arg0, %c0_i32 : i32, i32
  }
}

</mosaic_0001>

<llo_original>
// kernel: tpu_custom_call.1
$region0: #{tpu_custom_call.1}
  #allocation0 [shape = 'u32[]', space=smem, size = 0x4, offset = 0x4, fixed_abs, tag = 'smem constant byte address 0x4 - core index']
  #allocation1 [shape = 'u32[144,128]{1,0:T(1,128)}', space=vmem, size = 0x12000, scoped, tag = 'internal scratch']
  %s0 = inlined_call_operand.hbm [shape: f32[4], index: 0, kind: input, shape index: {}]
  %s1 = inlined_call_operand.hbm [shape: f32[4,512], index: 1, kind: input, shape index: {}]
  %s2 = inlined_call_operand.hbm [shape: f32[4,512], index: 2, kind: output, shape index: {}]
  %s3 = sld [smem:[#allocation0]]
  $region26: #{tpu_custom_call.1} parent=0
    _
  %s5 = ssub.s32 1, %s3
  %s6 = scalar_select 0, %s5, %s3
  $region1: #{tpu_custom_call.1} parent=0
    #allocation2 [shape = 'u8[512]{0}', space=smem, size = 0x200, scoped, tag = 'input window, operand 0, single buffered']
    #allocation3 [shape = 's32[1]{0}', space=sflag, size = 0x4, scoped, tag = 'scoped memory for tpu_custom_call.1']
    #allocation4 [shape = 's32[1]{0}', space=sflag, size = 0x4, scoped, tag = 'scoped memory for tpu_custom_call.1']
    #allocation5 [shape = 's32[1]{0}', space=sflag, size = 0x4, scoped, tag = 'scoped memory for tpu_custom_call.1']
    #allocation6 [shape = 'u8[8192]{0}', space=vmem, size = 0x2000, scoped, tag = 'input window, operand 1, single buffered']
    #allocation7 [shape = 'u8[8192]{0}', space=vmem, size = 0x2000, scoped, tag = 'output window, operand 0, single buffered']
    %7 = vsyncpa [#allocation5], 0
    %8 = vsyncpa [#allocation3], 0
    %9 = vsyncpa [#allocation4], 0
    // Predicated region
    $region2: #{tpu_custom_call.1} parent=1 // pred_check
      _
    $region3: #{tpu_custom_call.1} parent=1 // pred_check_branch
      %11 = sbr.rel (0) target = $region5
    $region4: #{tpu_custom_call.1} parent=1 // pred_region
      %s13 = ssub.s32 16, 16
      %14 = vsyncadd [#allocation5], %s13
      %17 = dma.hbm_to_smem %s0, 16, [#allocation2], [#allocation5]
    $region5: #{tpu_custom_call.1} parent=1 // pred_fallthru
      _
    // Predicated region
    $region6: #{tpu_custom_call.1} parent=1 // pred_check
      _
    $region7: #{tpu_custom_call.1} parent=1 // pred_check_branch
      %19 = sbr.rel (0) target = $region9
    $region8: #{tpu_custom_call.1} parent=1 // pred_region
      %s21 = ssub.s32 256, 256
      %22 = vsyncadd [#allocation3], %s21
      %s24 = sshll.u32 [#allocation6], 4
      %s25 = int_to_ptr.vmem [resolvable:$true] %s24
      %27 = dma.hbm_to_vmem [thread:$0]  %s1, 256, %s25, [#allocation3]
    $region9: #{tpu_custom_call.1} parent=1 // pred_fallthru
      _
    // Predicated region
    $region10: #{tpu_custom_call.1} parent=1 // pred_check
      _
    $region11: #{tpu_custom_call.1} parent=1 // pred_check_branch
      %29 = sbr.rel (0) target = $region13
    $region12: #{tpu_custom_call.1} parent=1 // pred_region
      %30 = dma.done [#allocation5], 16
    $region13: #{tpu_custom_call.1} parent=1 // pred_fallthru
      _
    // Predicated region
    $region14: #{tpu_custom_call.1} parent=1 // pred_check
      _
    $region15: #{tpu_custom_call.1} parent=1 // pred_check_branch
      %32 = sbr.rel (0) target = $region17
    $region16: #{tpu_custom_call.1} parent=1 // pred_region
      %33 = dma.done [#allocation3], 256
    $region17: #{tpu_custom_call.1} parent=1 // pred_fallthru
      _
    %34 = sfence
    %s35 = sld [smem:[#allocation2]]
    %s36 = sld [smem:[#allocation2 + $0x1]]
    %s37 = sld [smem:[#allocation2 + $0x2]]
    %s38 = sld [smem:[#allocation2 + $0x3]]
    %v39 = vld [vmem:[#allocation6] sm:$0xff]
    %v40 = vld [vmem:[#allocation6 + $0x8] sm:$0xff]
    %v41 = vstv %s35
    %v42 = vsub.f32 %v39, %v41
    %v43 = vsub.f32 %v40, %v41
    %v44 = vmul.f32 %v42, 2.0
    %v45 = vmul.f32 %v43, 2.0
    %v46 = vand.u32 2147483647, %v44
    %v47 = vand.u32 2147483647, %v45
    %v48 = vsub.f32 0.0, %v46
    %v49 = vsub.f32 0.0, %v47
    %v50 = vmul.f32 %v48, 1.442695
    %v51 = vpow.pop %v50
    %v52 = vmul.f32 %v49, 1.442695
    %v53 = vpow.pop %v52
    %v54 = vadd.f32 %v51, 1.0
    %v55 = vlog2.pop %v54
    %v56 = vmul.f32 %v55, 0.6931472
    %v57 = vmul.f32 -0.5, %v51
    %v58 = vadd.f32 %v57, 1.0
    %v59 = vmul.f32 %v58, %v51
    %v60 = vand.u32 2147483647, %v51
    %vm61 = vcmp.lt.f32.partialorder %v60, 0.0004427343
    %v62 = vsel %vm61, %v59, %v56
    %v63 = vadd.f32 %v53, 1.0
    %v64 = vlog2.pop %v63
    %v65 = vmul.f32 %v64, 0.6931472
    %v66 = vmul.f32 -0.5, %v53
    %v67 = vadd.f32 %v66, 1.0
    %v68 = vmul.f32 %v67, %v53
    %v69 = vand.u32 2147483647, %v53
    %vm70 = vcmp.lt.f32.partialorder %v69, 0.0004427343
    %v71 = vsel %vm70, %v68, %v65
    %v72 = vmax.f32 %v44, 0.0
    %v73 = vmax.f32 %v45, 0.0
    %v74 = vadd.f32 %v62, %v72
    %v75 = vadd.f32 %v71, %v73
    %v76 = vstv %s37
    %v77 = vmul.f32 %v76, %v42
    %v78 = vmul.f32 %v76, %v43
    %v79 = vstv %s36
    %v80 = vadd.f32 %v79, %v77
    %v81 = vadd.f32 %v79, %v78
    %v82 = vstv %s38
    %v83 = vmul.f32 %v82, %v74
    %v84 = vmul.f32 %v82, %v75
    %v85 = vadd.f32 %v80, %v83
    %v86 = vadd.f32 %v81, %v84
    %87 = vst [vmem:[#allocation7] sm:$0xff] %v85
    %88 = vst [vmem:[#allocation7 + $0x8] sm:$0xff] %v86
    // Predicated region
    $region18: #{tpu_custom_call.1} parent=1 // pred_check
      _
    $region19: #{tpu_custom_call.1} parent=1 // pred_check_branch
      %90 = sbr.rel (0) target = $region21
    $region20: #{tpu_custom_call.1} parent=1 // pred_region
      %s92 = ssub.s32 256, 256
      %93 = vsyncadd [#allocation4], %s92
      %s95 = sshll.u32 [#allocation7], 4
      %s96 = int_to_ptr.vmem [resolvable:$true] %s95
      %98 = dma.vmem_to_hbm [thread:$0]  %s96, 256, %s2, [#allocation4]
    $region21: #{tpu_custom_call.1} parent=1 // pred_fallthru
      _
    // Predicated region
    $region22: #{tpu_custom_call.1} parent=1 // pred_check
      _
    $region23: #{tpu_custom_call.1} parent=1 // pred_check_branch
      %100 = sbr.rel (0) target = $region25
    $region24: #{tpu_custom_call.1} parent=1 // pred_region
      %101 = dma.done [#allocation4], 256
    $region25: #{tpu_custom_call.1} parent=1 // pred_fallthru
      _
    %102 = vsyncpa [#allocation3], 1
    %103 = vsyncpa [#allocation4], 1
    %104 = vsyncpa [#allocation5], 1

</llo_original>
